<compile_context>
chip_gen: v5e
topology: v5e:2x2
jax: 0.10.0
libtpu: 0.0.40
codegen_flags: <defaults>
</compile_context>

<pallas_src>
import functools

import jax
import jax.numpy as jnp
from jax.experimental import pallas as pl
from jax.experimental.pallas import tpu as pltpu

GAMMA = 2.0
IGNORE_INDEX = -100


def _round_up(a, b):
    return ((a + b - 1) // b) * b


def _focal_loss_kernel(x_ref, t_ref, loss_ref, cnt_ref, *, gamma, ignore_index):
    n = pl.program_id(1)   # batch index            (arbitrary / reduction)
    j = pl.program_id(2)   # pixel-tile index       (arbitrary / reduction)

    # Output blocks are per-core accumulators (index depends only on the
    # leading parallel axis); zero them at the first reduction step.
    @pl.when((n == 0) & (j == 0))
    def _():
        loss_ref[...] = jnp.zeros_like(loss_ref)
        cnt_ref[...] = jnp.zeros_like(cnt_ref)

    x = x_ref[...].astype(jnp.float32)   # (1, C, T)  classes on sublanes, pixels on lanes
    t = t_ref[...]                       # (1, 1, T)  int32

    # log-softmax pieces over the class (sublane) axis.
    m = jnp.max(x, axis=1, keepdims=True)                    # (1, 1, T)
    z = x - m                                                 # (1, C, T)
    sumexp = jnp.sum(jnp.exp(z), axis=1, keepdims=True)       # (1, 1, T)
    lse = jnp.log(sumexp)                                     # (1, 1, T)

    # Gather the target-class shifted logit with one masked sublane reduce.
    cls_ids = jax.lax.broadcasted_iota(jnp.int32, x.shape, 1)  # (1, C, T)
    onehot = cls_ids == t                                      # (1, C, T) bool
    z_t = jnp.sum(jnp.where(onehot, z, 0.0), axis=1, keepdims=True)  # (1, 1, T)

    logpt_t = z_t - lse                                        # (1, 1, T)
    pt_t = jnp.exp(logpt_t)                                    # O(T) EUP work only

    # Focal modulation (1 - pt)**gamma without lax.pow when gamma is integral.
    q = 1.0 - pt_t
    if gamma == 2:
        mod = q * q
    elif float(gamma) == int(gamma) and gamma >= 0:
        mod = jnp.ones_like(q)
        for _ in range(int(gamma)):
            mod = mod * q
    else:
        mod = q ** gamma
    focal_t = mod * logpt_t                                    # (1, 1, T)

    valid = t != ignore_index                                  # (1, 1, T) bool
    loss_px = jnp.where(valid, -focal_t, 0.0)                  # (1, 1, T)
    cnt_px = valid.astype(jnp.float32)                         # (1, 1, T)

    # Lane-dense elementwise accumulation (no in-kernel cross-lane reduce,
    # no 1-wide masked stores per step).
    loss_ref[...] += loss_px
    cnt_ref[...] += cnt_px


def focal_loss(output, target, *, gamma=GAMMA, ignore_index=IGNORE_INDEX,
               max_tile_hw=8192):
    """output: (N, C, H, W) float (f32 or bf16); target: (N, H, W) int.

    Returns the scalar focal loss (mean over non-ignored elements)."""
    N, C, H, W = output.shape
    HW = H * W

    # Free reshapes (trailing-dim merge / size-1 insert): no HBM copies.
    x = output.reshape(N, C, HW)
    t = target.reshape(N, 1, HW).astype(jnp.int32)

    # Pick the pixel tile: lane-dense (multiple of 128), as large as a
    # v7x-safe VMEM budget allows (double-buffered logits + targets + the two
    # per-core accumulator blocks), capped by max_tile_hw and by HW itself.
    vmem_budget = 24 * 1024 * 1024                 # leave headroom under 32 MiB scoped
    bytes_per_px = 8 * C + 8 + 16                  # 2x(C*4) logits + 2x4 tgt + 2 outs x 2buf x 4
    cap_px = max(128, (vmem_budget // bytes_per_px) // 128 * 128)
    tile_hw = min(max_tile_hw, cap_px, _round_up(HW, 128))

    # Even number of pixel tiles so the leading parallel axis (2 cores on
    # v7x) splits the work cleanly; padded pixels carry ignore_index.
    HWp = _round_up(HW, 2 * tile_hw)
    if HWp != HW:
        pad = HWp - HW
        x = jnp.pad(x, ((0, 0), (0, 0), (0, pad)))
        t = jnp.pad(t, ((0, 0), (0, 0), (0, pad)), constant_values=ignore_index)
    hw_blocks = HWp // tile_hw
    half = hw_blocks // 2

    kernel = functools.partial(_focal_loss_kernel, gamma=gamma,
                               ignore_index=ignore_index)

    loss_parts, cnt_parts = pl.pallas_call(
        kernel,
        out_shape=(jax.ShapeDtypeStruct((2, 1, tile_hw), jnp.float32),
                   jax.ShapeDtypeStruct((2, 1, tile_hw), jnp.float32)),
        grid_spec=pltpu.PrefetchScalarGridSpec(
            num_scalar_prefetch=0,
            grid=(2, N, half),                       # (core, batch, pixel-tiles/core)
            in_specs=[
                pl.BlockSpec((1, C, tile_hw),
                             lambda c, n, j: (n, 0, c * half + j)),
                pl.BlockSpec((1, 1, tile_hw),
                             lambda c, n, j: (n, 0, c * half + j)),
            ],
            out_specs=[
                pl.BlockSpec((1, 1, tile_hw), lambda c, n, j: (c, 0, 0)),
                pl.BlockSpec((1, 1, tile_hw), lambda c, n, j: (c, 0, 0)),
            ],
        ),
        compiler_params=pltpu.CompilerParams(
            dimension_semantics=("parallel", "arbitrary", "arbitrary"),
            vmem_limit_bytes=32 * 1024 * 1024),
    )(x, t)

    total_loss = jnp.sum(loss_parts)
    total_cnt = jnp.sum(cnt_parts)
    # Matches F.nll_loss(reduction='mean') incl. NaN when every target is ignored.
    return total_loss / total_cnt


def focal_loss_ref(output, target, *, gamma=GAMMA, ignore_index=IGNORE_INDEX):
    """Pure-JAX reference for verification."""
    logpt = jax.nn.log_softmax(output, axis=1)          # (N, C, H, W)
    pt = jnp.exp(logpt)
    focal = ((1.0 - pt) ** gamma) * logpt
    t = target.astype(jnp.int32)
    valid = t != ignore_index
    t_safe = jnp.where(valid, t, 0)
    gathered = jnp.take_along_axis(focal, t_safe[:, None, :, :], axis=1)[:, 0]
    loss = jnp.where(valid, -gathered, 0.0)
    return jnp.sum(loss) / jnp.sum(valid.astype(jnp.float32))


if __name__ == "__main__":
    key = jax.random.PRNGKey(0)
    k1, k2 = jax.random.split(key)

    N, C, H, W = 2, 4, 16, 16
    output = jax.random.normal(k1, (N, C, H, W), dtype=jnp.float32)
    target = jax.random.randint(k2, (N, H, W), 0, C, dtype=jnp.int32)
    # sprinkle a few ignore_index labels to exercise masking
    target = target.at[0, 0, :4].set(IGNORE_INDEX)

    loss = jax.block_until_ready(focal_loss(output, target))
    ref = jax.block_until_ready(focal_loss_ref(output, target))

    assert jnp.allclose(loss, ref, rtol=1e-5, atol=1e-6), (loss, ref)
    print("KERNEL_OK")
</pallas_src>

<mosaic_0001>
module attributes {stable_mosaic.version = 11 : i64} {
  func.func @_focal_loss_kernel(%arg0: i32, %arg1: i32, %arg2: i32, %arg3: memref<1x4x256xf32, #tpu.memory_space<vmem>>, %arg4: memref<1x1x256xi32, #tpu.memory_space<vmem>>, %arg5: memref<1x1x256xf32, #tpu.memory_space<vmem>>, %arg6: memref<1x1x256xf32, #tpu.memory_space<vmem>>) attributes {dimension_semantics = [#tpu.dimension_semantics<parallel>, #tpu.dimension_semantics<arbitrary>, #tpu.dimension_semantics<arbitrary>], iteration_bounds = array<i64: 2, 2, 1>, scalar_prefetch = 0 : i64, scratch_operands = 0 : i64, tpu.core_type = #tpu.core_type<tc>, window_params = [{transform_indices = @transform_0, window_bounds = array<i64: 1, 4, 256>}, {transform_indices = @transform_1, window_bounds = array<i64: 1, 1, 256>}, {transform_indices = @transform_2, window_bounds = array<i64: 1, 1, 256>}, {transform_indices = @transform_3, window_bounds = array<i64: 1, 1, 256>}]} {
    %c0_i32 = arith.constant 0 : i32
    %0 = arith.cmpi eq, %arg1, %c0_i32 : i32
    %c0_i32_0 = arith.constant 0 : i32
    %1 = arith.cmpi eq, %arg2, %c0_i32_0 : i32
    %2 = arith.andi %0, %1 : i1
    %3 = arith.extui %2 : i1 to i32
    %c0_i32_1 = arith.constant 0 : i32
    %4 = arith.cmpi ne, %3, %c0_i32_1 : i32
    scf.if %4 {
      %cst_25 = arith.constant 0.000000e+00 : f32
      %42 = vector.broadcast %cst_25 : f32 to vector<1x1x256xf32>
      %c0_26 = arith.constant 0 : index
      %c0_27 = arith.constant 0 : index
      %c0_28 = arith.constant 0 : index
      %43 = vector.load %arg5[%c0_26, %c0_27, %c0_28] : memref<1x1x256xf32, #tpu.memory_space<vmem>>, vector<1x1x256xf32>
      tpu.vector_store %arg5[%c0_26, %c0_27, %c0_28], %42 {strides = array<i32>} : memref<1x1x256xf32, #tpu.memory_space<vmem>>, vector<1x1x256xf32>,
      %cst_29 = arith.constant 0.000000e+00 : f32
      %44 = vector.broadcast %cst_29 : f32 to vector<1x1x256xf32>
      %c0_30 = arith.constant 0 : index
      %c0_31 = arith.constant 0 : index
      %c0_32 = arith.constant 0 : index
      %45 = vector.load %arg6[%c0_30, %c0_31, %c0_32] : memref<1x1x256xf32, #tpu.memory_space<vmem>>, vector<1x1x256xf32>
      tpu.vector_store %arg6[%c0_30, %c0_31, %c0_32], %44 {strides = array<i32>} : memref<1x1x256xf32, #tpu.memory_space<vmem>>, vector<1x1x256xf32>,
    } else {
    }
    %c0 = arith.constant 0 : index
    %c0_2 = arith.constant 0 : index
    %c0_3 = arith.constant 0 : index
    %5 = vector.load %arg3[%c0, %c0_2, %c0_3] : memref<1x4x256xf32, #tpu.memory_space<vmem>>, vector<1x4x256xf32>
    %c0_4 = arith.constant 0 : index
    %c0_5 = arith.constant 0 : index
    %c0_6 = arith.constant 0 : index
    %6 = vector.load %arg4[%c0_4, %c0_5, %c0_6] : memref<1x1x256xi32, #tpu.memory_space<vmem>>, vector<1x1x256xi32>
    %cst = arith.constant dense<0xFF800000> : vector<1x256xf32>
    %7 = vector.multi_reduction <maximumf>, %5, %cst [1] : vector<1x4x256xf32> to vector<1x256xf32>
    %8 = vector.shape_cast %7 : vector<1x256xf32> to vector<1x1x256xf32>
    %9 = vector.broadcast %8 : vector<1x1x256xf32> to vector<1x4x256xf32>
    %10 = arith.subf %5, %9 : vector<1x4x256xf32>
    %11 = math.exp %10 : vector<1x4x256xf32>
    %cst_7 = arith.constant dense<0.000000e+00> : vector<1x256xf32>
    %12 = vector.multi_reduction <add>, %11, %cst_7 [1] : vector<1x4x256xf32> to vector<1x256xf32>
    %13 = vector.shape_cast %12 : vector<1x256xf32> to vector<1x1x256xf32>
    %14 = math.log %13 : vector<1x1x256xf32>
    %15 = tpu.iota {dimensions = array<i32: 1>} : vector<1x4x256xi32>
    %16 = vector.broadcast %6 : vector<1x1x256xi32> to vector<1x4x256xi32>
    %17 = arith.cmpi eq, %15, %16 : vector<1x4x256xi32>
    %cst_8 = arith.constant 0.000000e+00 : f32
    %18 = vector.broadcast %cst_8 : f32 to vector<1x4x256xf32>
    %19 = arith.select %17, %10, %18 : vector<1x4x256xi1>, vector<1x4x256xf32>
    %cst_9 = arith.constant dense<0.000000e+00> : vector<1x256xf32>
    %20 = vector.multi_reduction <add>, %19, %cst_9 [1] : vector<1x4x256xf32> to vector<1x256xf32>
    %21 = vector.shape_cast %20 : vector<1x256xf32> to vector<1x1x256xf32>
    %22 = arith.subf %21, %14 : vector<1x1x256xf32>
    %23 = math.exp %22 : vector<1x1x256xf32>
    %cst_10 = arith.constant 1.000000e+00 : f32
    %24 = vector.broadcast %cst_10 : f32 to vector<1x1x256xf32>
    %25 = arith.subf %24, %23 : vector<1x1x256xf32>
    %26 = arith.mulf %25, %25 : vector<1x1x256xf32>
    %27 = arith.mulf %26, %22 : vector<1x1x256xf32>
    %c-100_i32 = arith.constant -100 : i32
    %28 = vector.broadcast %c-100_i32 : i32 to vector<1x1x256xi32>
    %29 = arith.cmpi ne, %6, %28 : vector<1x1x256xi32>
    %cst_11 = arith.constant 0.000000e+00 : f32
    %30 = vector.broadcast %cst_11 : f32 to vector<1x1x256xf32>
    %31 = arith.subf %30, %27 : vector<1x1x256xf32>
    %cst_12 = arith.constant 0.000000e+00 : f32
    %32 = vector.broadcast %cst_12 : f32 to vector<1x1x256xf32>
    %33 = arith.select %29, %31, %32 : vector<1x1x256xi1>, vector<1x1x256xf32>
    %34 = arith.extui %29 : vector<1x1x256xi1> to vector<1x1x256xi32>
    %35 = arith.sitofp %34 : vector<1x1x256xi32> to vector<1x1x256xf32>
    %c0_13 = arith.constant 0 : index
    %c0_14 = arith.constant 0 : index
    %c0_15 = arith.constant 0 : index
    %36 = vector.load %arg5[%c0_13, %c0_14, %c0_15] : memref<1x1x256xf32, #tpu.memory_space<vmem>>, vector<1x1x256xf32>
    %37 = arith.addf %36, %33 : vector<1x1x256xf32>
    %c0_16 = arith.constant 0 : index
    %c0_17 = arith.constant 0 : index
    %c0_18 = arith.constant 0 : index
    %38 = vector.load %arg5[%c0_16, %c0_17, %c0_18] : memref<1x1x256xf32, #tpu.memory_space<vmem>>, vector<1x1x256xf32>
    tpu.vector_store %arg5[%c0_16, %c0_17, %c0_18], %37 {strides = array<i32>} : memref<1x1x256xf32, #tpu.memory_space<vmem>>, vector<1x1x256xf32>,
    %c0_19 = arith.constant 0 : index
    %c0_20 = arith.constant 0 : index
    %c0_21 = arith.constant 0 : index
    %39 = vector.load %arg6[%c0_19, %c0_20, %c0_21] : memref<1x1x256xf32, #tpu.memory_space<vmem>>, vector<1x1x256xf32>
    %40 = arith.addf %39, %35 : vector<1x1x256xf32>
    %c0_22 = arith.constant 0 : index
    %c0_23 = arith.constant 0 : index
    %c0_24 = arith.constant 0 : index
    %41 = vector.load %arg6[%c0_22, %c0_23, %c0_24] : memref<1x1x256xf32, #tpu.memory_space<vmem>>, vector<1x1x256xf32>
    tpu.vector_store %arg6[%c0_22, %c0_23, %c0_24], %40 {strides = array<i32>} : memref<1x1x256xf32, #tpu.memory_space<vmem>>, vector<1x1x256xf32>,
    return
  }
  func.func @transform_0(%arg0: i32, %arg1: i32, %arg2: i32) -> (i32, i32, i32) {
    %c1_i32 = arith.constant 1 : i32
    %0 = arith.muli %arg0, %c1_i32 : i32
    %1 = arith.addi %0, %arg2 : i32
    %c0_i32 = arith.constant 0 : i32
    %c0_i32_0 = arith.constant 0 : i32
    return %arg1, %c0_i32, %1 : i32, i32, i32
  }
  func.func @transform_1(%arg0: i32, %arg1: i32, %arg2: i32) -> (i32, i32, i32) {
    %c1_i32 = arith.constant 1 : i32
    %0 = arith.muli %arg0, %c1_i32 : i32
    %1 = arith.addi %0, %arg2 : i32
    %c0_i32 = arith.constant 0 : i32
    %c0_i32_0 = arith.constant 0 : i32
    return %arg1, %c0_i32, %1 : i32, i32, i32
  }
  func.func @transform_2(%arg0: i32, %arg1: i32, %arg2: i32) -> (i32, i32, i32) {
    %c0_i32 = arith.constant 0 : i32
    %c0_i32_0 = arith.constant 0 : i32
    %c0_i32_1 = arith.constant 0 : i32
    return %arg0, %c0_i32, %c0_i32_0 : i32, i32, i32
  }
  func.func @transform_3(%arg0: i32, %arg1: i32, %arg2: i32) -> (i32, i32, i32) {
    %c0_i32 = arith.constant 0 : i32
    %c0_i32_0 = arith.constant 0 : i32
    %c0_i32_1 = arith.constant 0 : i32
    return %arg0, %c0_i32, %c0_i32_0 : i32, i32, i32
  }
}

</mosaic_0001>

<llo_original>
// kernel: tpu_custom_call.1
$region0: #{tpu_custom_call.1}
  #allocation0 [shape = 'u32[]', space=smem, size = 0x4, offset = 0x4, fixed_abs, tag = 'smem constant byte address 0x4 - core index']
  #allocation1 [shape = 'u32[72,128]{1,0:T(1,128)}', space=vmem, size = 0x9000, scoped, tag = 'internal scratch']
  %s0 = inlined_call_operand.hbm [shape: f32[2,4,512], index: 0, kind: input, shape index: {}]
  %s1 = inlined_call_operand.hbm [shape: s32[2,1,512], index: 1, kind: input, shape index: {}]
  %s2 = inlined_call_operand.hbm [shape: f32[2,1,256], index: 2, kind: output, shape index: {0}]
  %s3 = inlined_call_operand.hbm [shape: f32[2,1,256], index: 3, kind: output, shape index: {1}]
  %4 = xla_tuple %s2, %s3
  %s5 = sld [smem:[#allocation0]]
  $region61: #{tpu_custom_call.1} parent=0
    _
  %s7 = ssub.s32 1, %s5
  %s8 = scalar_select 0, %s7, %s5
  $region1: #{tpu_custom_call.1} parent=0
    #allocation2 [shape = 'u8[8192]{0}', space=vmem, size = 0x2000, scoped, tag = 'input window, operand 0']
    #allocation3 [shape = 's32[2]{0}', space=sflag, size = 0x8, scoped, tag = 'scoped memory for tpu_custom_call.1']
    #allocation4 [shape = 's32[2]{0}', space=sflag, size = 0x8, scoped, tag = 'scoped memory for tpu_custom_call.1']
    #allocation5 [shape = 'u8[2048]{0}', space=vmem, size = 0x800, scoped, tag = 'input window, operand 1']
    #allocation6 [shape = 's32[2]{0}', space=sflag, size = 0x8, scoped, tag = 'scoped memory for tpu_custom_call.1']
    #allocation7 [shape = 'u8[2048]{0}', space=vmem, size = 0x800, scoped, tag = 'output window, operand 0']
    #allocation8 [shape = 'u8[2048]{0}', space=vmem, size = 0x800, scoped, tag = 'output window, operand 1']
    #allocation9 [shape = 's32[2]{0}', space=sflag, size = 0x8, scoped, tag = 'scoped memory for tpu_custom_call.1']
    %9 = vsyncpa [#allocation3], 0
    %s10 = scalar_lea.sflag [#allocation3], 1
    %11 = vsyncpa %s10, 0
    %12 = vsyncpa [#allocation6], 0
    %s13 = scalar_lea.sflag [#allocation6], 1
    %14 = vsyncpa %s13, 0
    %15 = vsyncpa [#allocation4], 0
    %s16 = scalar_lea.sflag [#allocation4], 1
    %17 = vsyncpa %s16, 0
    %18 = vsyncpa [#allocation9], 0
    %s19 = scalar_lea.sflag [#allocation9], 1
    %20 = vsyncpa %s19, 0
    loop: start=0, step=1, limit=6
    $region2: #{tpu_custom_call.1} parent=1 // loop_pre_header
      _
    $region3: #{tpu_custom_call.1} parent=1 // loop_header
      %s22 = sphi 0, %s26
      %p23 = scmp.ge.s32.totalorder %s22, 6
      %s29 = sphi 0, %s48
      %s30 = sphi 0, %s44
      %s31 = sphi 0, %s40
      %s32 = sphi 0, %s29
      %s33 = sphi 0, %s30
      %s34 = sphi 0, %s31
      %s35 = sphi 0, %s32
      %s36 = sphi 0, %s33
      %s37 = sphi 0, %s34
      %s55 = sphi 0, %s57
      %s58 = sphi 0, %s55
      %s59 = sphi 0, %s58
      %s75 = sphi 0, %s59
      %s85 = sphi 0, %s87
      %s88 = sphi 0, %s85
      %s89 = sphi 0, %s88
      %s105 = sphi 0, %s89
      %s111 = sphi 0, %s113
      %s114 = sphi 0, %s111
      %s115 = sphi 0, %s114
      %s131 = sphi 0, %s115
      %s137 = sphi 0, %s139
      %s140 = sphi 0, %s137
      %s141 = sphi 0, %s140
      %s157 = sphi 0, %s141
    $region4: #{tpu_custom_call.1} parent=1 // loop_header_branch
      %25 = sbr.rel (%p23) target = $region8
    $region5: #{tpu_custom_call.1} parent=1 // loop_body
      %s27 = ssub.s32 %s22, 1
      %s28 = ssub.s32 %s22, 2
      %s38 = sadd.s32 1, %s31
      %p39 = scmp.ge.s32.totalorder %s38, 1
      %s40 = scalar_select %p39, 0, %s38
      %s41 = sadd.s32 1, %s30
      %s42 = scalar_select %p39, %s41, %s30
      %p43 = scmp.ge.s32.totalorder %s42, 2
      %s44 = scalar_select %p43, 0, %s42
      %s45 = sadd.s32 1, %s29
      %s46 = scalar_select %p43, %s45, %s29
      %p47 = scmp.ge.s32.totalorder %s46, 2
      %s48 = scalar_select %p47, 0, %s46
      %s49 = sadd.s32 %s29, %s31
      %s50 = sadd.s32 %s48, %s40
      %s51 = ssub.s32 %s30, %s44
      %s52 = ssub.s32 %s49, %s50
      %s53 = sor.u32 %s51, %s52
      %p54 = scmp.eq.s32.totalorder %s53, 0
      %s56 = sadd.s32 %s55, 1
      %s57 = scalar_select %p54, %s55, %s56
      %p60 = pneg %p54
      %p61 = scmp.eq.s32.totalorder %s22, 3
      %p62 = por %p60, %p61
      %p63 = scmp.ne.s32.totalorder %s55, %s58
      %p64 = scmp.eq.s32.totalorder %s22, 0
      %p65 = por %p63, %p64
      %p66 = scmp.ne.s32.totalorder %s55, %s58
      %p67 = scmp.eq.s32.totalorder %s27, 3
      %p68 = por %p66, %p67
      %p69 = scmp.ne.s32.totalorder %s58, %s59
      %p70 = scmp.eq.s32.totalorder %s27, 0
      %p71 = por %p69, %p70
      %p72 = scmp.ne.s32.totalorder %s58, %s59
      %p73 = scmp.eq.s32.totalorder %s28, 3
      %p74 = por %p72, %p73
      %p76 = scmp.ne.s32.totalorder %s59, %s75
      %p77 = scmp.eq.s32.totalorder %s28, 0
      %p78 = por %p76, %p77
      %s79 = sadd.s32 %s29, %s31
      %s80 = sadd.s32 %s48, %s40
      %s81 = ssub.s32 %s30, %s44
      %s82 = ssub.s32 %s79, %s80
      %s83 = sor.u32 %s81, %s82
      %p84 = scmp.eq.s32.totalorder %s83, 0
      %s86 = sadd.s32 %s85, 1
      %s87 = scalar_select %p84, %s85, %s86
      %p90 = pneg %p84
      %p91 = scmp.eq.s32.totalorder %s22, 3
      %p92 = por %p90, %p91
      %p93 = scmp.ne.s32.totalorder %s85, %s88
      %p94 = scmp.eq.s32.totalorder %s22, 0
      %p95 = por %p93, %p94
      %p96 = scmp.ne.s32.totalorder %s85, %s88
      %p97 = scmp.eq.s32.totalorder %s27, 3
      %p98 = por %p96, %p97
      %p99 = scmp.ne.s32.totalorder %s88, %s89
      %p100 = scmp.eq.s32.totalorder %s27, 0
      %p101 = por %p99, %p100
      %p102 = scmp.ne.s32.totalorder %s88, %s89
      %p103 = scmp.eq.s32.totalorder %s28, 3
      %p104 = por %p102, %p103
      %p106 = scmp.ne.s32.totalorder %s89, %s105
      %p107 = scmp.eq.s32.totalorder %s28, 0
      %p108 = por %p106, %p107
      %s109 = ssub.s32 %s29, %s48
      %p110 = scmp.eq.s32.totalorder %s109, 0
      %s112 = sadd.s32 %s111, 1
      %s113 = scalar_select %p110, %s111, %s112
      %p116 = pneg %p110
      %p117 = scmp.eq.s32.totalorder %s22, 3
      %p118 = por %p116, %p117
      %p119 = scmp.ne.s32.totalorder %s111, %s114
      %p120 = scmp.eq.s32.totalorder %s22, 0
      %p121 = por %p119, %p120
      %p122 = scmp.ne.s32.totalorder %s111, %s114
      %p123 = scmp.eq.s32.totalorder %s27, 3
      %p124 = por %p122, %p123
      %p125 = scmp.ne.s32.totalorder %s114, %s115
      %p126 = scmp.eq.s32.totalorder %s27, 0
      %p127 = por %p125, %p126
      %p128 = scmp.ne.s32.totalorder %s114, %s115
      %p129 = scmp.eq.s32.totalorder %s28, 3
      %p130 = por %p128, %p129
      %p132 = scmp.ne.s32.totalorder %s115, %s131
      %p133 = scmp.eq.s32.totalorder %s28, 0
      %p134 = por %p132, %p133
      %s135 = ssub.s32 %s29, %s48
      %p136 = scmp.eq.s32.totalorder %s135, 0
      %s138 = sadd.s32 %s137, 1
      %s139 = scalar_select %p136, %s137, %s138
      %p142 = pneg %p136
      %p143 = scmp.eq.s32.totalorder %s22, 3
      %p144 = por %p142, %p143
      %p145 = scmp.ne.s32.totalorder %s137, %s140
      %p146 = scmp.eq.s32.totalorder %s22, 0
      %p147 = por %p145, %p146
      %p148 = scmp.ne.s32.totalorder %s137, %s140
      %p149 = scmp.eq.s32.totalorder %s27, 3
      %p150 = por %p148, %p149
      %p151 = scmp.ne.s32.totalorder %s140, %s141
      %p152 = scmp.eq.s32.totalorder %s27, 0
      %p153 = por %p151, %p152
      %p154 = scmp.ne.s32.totalorder %s140, %s141
      %p155 = scmp.eq.s32.totalorder %s28, 3
      %p156 = por %p154, %p155
      %p158 = scmp.ne.s32.totalorder %s141, %s157
      %p159 = scmp.eq.s32.totalorder %s28, 0
      %p160 = por %p158, %p159
      %p161 = scmp.le.s32.totalorder 1, %s22
      %p162 = scmp.lt.s32.totalorder %s22, 5
      %p163 = pnand %p161, %p162
      %p164 = pneg %p163
      // Predicated region
      $region9: #{tpu_custom_call.1} parent=5 // pred_check
        _
      $region10: #{tpu_custom_call.1} parent=5 // pred_check_branch
        %166 = sbr.rel (%p163) target = $region12
      $region11: #{tpu_custom_call.1} parent=5 // pred_region
        %s167 = ssub.s32 %s22, 1
      $region12: #{tpu_custom_call.1} parent=5 // pred_fallthru
        _
      %p168 = scmp.lt.s32.totalorder %s22, 4
      // Predicated region
      $region13: #{tpu_custom_call.1} parent=5 // pred_check
        %p169 = pneg %p168
      $region14: #{tpu_custom_call.1} parent=5 // pred_check_branch
        %171 = sbr.rel (%p169) target = $region16
      $region15: #{tpu_custom_call.1} parent=5 // pred_region
        // Predicated region
        $region17: #{tpu_custom_call.1} parent=15 // pred_check
          %p172 = pneg %p65
        $region18: #{tpu_custom_call.1} parent=15 // pred_check_branch
          %174 = sbr.rel (%p172) target = $region20
        $region19: #{tpu_custom_call.1} parent=15 // pred_region
          %s175 = sand.u32 %s55, 1
          %s176 = scalar_lea.sflag [#allocation3], %s175
          %s177 = sand.u32 %s55, 1
          %s178 = smul.addr %s177, 8
          %s179 = scalar_lea.vmem [#allocation2], %s178
          %s180 = sadd.s32 %s29, %s31
          %s181 = smul.u32 2, %s180
          %183 = vsyncadd %s176, 0
          %s184 = smul.addr %s30, 4
          %s185 = sadd.s32 %s181, %s184
          %s186 = smul.addr %s185, 4
          %s187 = scalar_lea.hbm %s0, %s186
          %s189 = sshll.u32 %s187, 4
          %s190 = int_to_ptr.hbm [resolvable:$true] %s189
          %s191 = sshll.u32 %s179, 4
          %s192 = int_to_ptr.vmem [resolvable:$true] %s191
          %194 = dma.hbm_to_vmem [thread:$0]  %s190, 128, %s192, %s176
        $region20: #{tpu_custom_call.1} parent=15 // pred_fallthru
          _
        // Predicated region
        $region21: #{tpu_custom_call.1} parent=15 // pred_check
          %p195 = pneg %p95
        $region22: #{tpu_custom_call.1} parent=15 // pred_check_branch
          %197 = sbr.rel (%p195) target = $region24
        $region23: #{tpu_custom_call.1} parent=15 // pred_region
          %s198 = sand.u32 %s85, 1
          %s199 = scalar_lea.sflag [#allocation6], %s198
          %s200 = sand.u32 %s85, 1
          %s201 = smul.addr %s200, 2
          %s202 = scalar_lea.vmem [#allocation5], %s201
          %s203 = sadd.s32 %s29, %s31
          %s204 = smul.u32 2, %s203
          %206 = vsyncadd %s199, 0
          %s207 = smul.addr %s30, 4
          %s208 = sadd.s32 %s204, %s207
          %s209 = scalar_lea.hbm %s1, %s208
          %s211 = sshll.u32 %s209, 4
          %s212 = int_to_ptr.hbm [resolvable:$true] %s211
          %s213 = sshll.u32 %s202, 4
          %s214 = int_to_ptr.vmem [resolvable:$true] %s213
          %216 = dma.hbm_to_vmem [thread:$0]  %s212, 32, %s214, %s199
        $region24: #{tpu_custom_call.1} parent=15 // pred_fallthru
          _
      $region16: #{tpu_custom_call.1} parent=5 // pred_fallthru
        _
      %p217 = scmp.le.s32.totalorder 1, %s22
      %p218 = scmp.lt.s32.totalorder %s22, 5
      %p219 = pnand %p217, %p218
      %p220 = pneg %p219
      // Predicated region
      $region25: #{tpu_custom_call.1} parent=5 // pred_check
        _
      $region26: #{tpu_custom_call.1} parent=5 // pred_check_branch
        %222 = sbr.rel (%p219) target = $region28
      $region27: #{tpu_custom_call.1} parent=5 // pred_region
        %s223 = ssub.s32 %s22, 1
        %s224 = sand.u32 %s58, 1
        %s225 = scalar_lea.sflag [#allocation3], %s224
        %s226 = sand.u32 %s58, 1
        %s227 = smul.addr %s226, 8
        %s228 = scalar_lea.vmem [#allocation2], %s227
        // Predicated region
        $region29: #{tpu_custom_call.1} parent=27 // pred_check
          %p229 = pneg %p71
        $region30: #{tpu_custom_call.1} parent=27 // pred_check_branch
          %231 = sbr.rel (%p229) target = $region32
        $region31: #{tpu_custom_call.1} parent=27 // pred_region
          %233 = dma.done %s225, 128
        $region32: #{tpu_custom_call.1} parent=27 // pred_fallthru
          _
        %s234 = sand.u32 %s88, 1
        %s235 = scalar_lea.sflag [#allocation6], %s234
        %s236 = sand.u32 %s88, 1
        %s237 = smul.addr %s236, 2
        %s238 = scalar_lea.vmem [#allocation5], %s237
        // Predicated region
        $region33: #{tpu_custom_call.1} parent=27 // pred_check
          %p239 = pneg %p101
        $region34: #{tpu_custom_call.1} parent=27 // pred_check_branch
          %241 = sbr.rel (%p239) target = $region36
        $region35: #{tpu_custom_call.1} parent=27 // pred_region
          %243 = dma.done %s235, 32
        $region36: #{tpu_custom_call.1} parent=27 // pred_fallthru
          _
        %s244 = sand.u32 %s58, 1
        %s245 = scalar_lea.sflag [#allocation3], %s244
        %s246 = sand.u32 %s58, 1
        %s247 = smul.addr %s246, 8
        %s248 = scalar_lea.vmem [#allocation2], %s247
        %p249 = pneg %p71
        %p250 = pneg %p68
        %s251 = sand.u32 %s88, 1
        %s252 = scalar_lea.sflag [#allocation6], %s251
        %s253 = sand.u32 %s88, 1
        %s254 = smul.addr %s253, 2
        %s255 = scalar_lea.vmem [#allocation5], %s254
        %p256 = pneg %p101
        %p257 = pneg %p98
        %p258 = pneg %p127
        %p259 = pneg %p124
        %s260 = sand.u32 %s114, 1
        %s261 = scalar_lea.sflag [#allocation4], %s260
        %s262 = sand.u32 %s114, 1
        %s263 = smul.addr %s262, 2
        %s264 = scalar_lea.vmem [#allocation7], %s263
        %p265 = pneg %p153
        %p266 = pneg %p150
        %s267 = sand.u32 %s140, 1
        %s268 = scalar_lea.sflag [#allocation9], %s267
        %s269 = sand.u32 %s140, 1
        %s270 = smul.addr %s269, 2
        %s271 = scalar_lea.vmem [#allocation8], %s270
        %s272 = sadd.s32 %s32, %s34
        %s273 = smul.u32 2, %s272
        %s274 = sadd.s32 %s32, %s34
        %s275 = smul.u32 2, %s274
        %p276 = scmp.eq.s32.totalorder %s33, 0
        %p277 = scmp.eq.s32.totalorder %s34, 0
        %p278 = pnand %p276, %p277
        %p279 = pneg %p278
        // Predicated region
        $region37: #{tpu_custom_call.1} parent=27 // pred_check
          _
        $region38: #{tpu_custom_call.1} parent=27 // pred_check_branch
          %281 = sbr.rel (%p278) target = $region40
        $region39: #{tpu_custom_call.1} parent=27 // pred_region
          %v282 = vlaneseq
          %vm283 = vcmp.ge.s32.totalorder %v282, 0
          %vm284 = vcmp.lt.s32.totalorder %v282, 256
          %vm285 = vmand %vm283, %vm284
          %286 = vst.msk [vmem:[%s264] sm:$0x3] %vm285, 0.0
          %287 = vst.msk [vmem:[%s271] sm:$0x3] %vm285, 0.0
        $region40: #{tpu_custom_call.1} parent=27 // pred_fallthru
          _
        %v288 = vld [vmem:[%s228] sm:$0xff]
        %v289 = vld [vmem:[%s238] sm:$0x3]
        %291 = vst [vmem:[#allocation1] ss:$2 sm:$0xff] %v288
        %v292 = vld.sshfl [vmem:[#allocation1] sm:$0xff pattern:$0x75316420]
        %v293 = vld.sshfl [vmem:[#allocation1 + $0x8] sm:$0xff pattern:$0x75316420]
        %vm296 = vcmask 1043456
        %v297 = vsel %vm296, %v292, -inf
        %v298 = vrot.slane %v297, 4
        %v299 = vmax.f32 %v297, %v298
        %v300 = vrot.slane %v299, 2
        %v301 = vmax.f32 %v299, %v300
        %v302 = vrot.slane %v301, 1
        %v303 = vmax.f32 %v301, %v302
        %v304 = vsel %vm296, %v293, -inf
        %v305 = vrot.slane %v304, 4
        %v306 = vmax.f32 %v304, %v305
        %v307 = vrot.slane %v306, 2
        %v308 = vmax.f32 %v306, %v307
        %v309 = vrot.slane %v308, 1
        %v310 = vmax.f32 %v308, %v309
        %v313 = vrot.slane %v310, 4
        %v314 = vsel %vm296, %v303, %v313
        %v316 = vsub.f32 %v288, %v314
        %v317 = vmul.f32 %v316, 1.442695
        %v318 = vpow.pop %v317
        %320 = vst [vmem:[#allocation1] ss:$2 sm:$0xff] %v318
        %v321 = vld.sshfl [vmem:[#allocation1] sm:$0xff pattern:$0x75316420]
        %v322 = vld.sshfl [vmem:[#allocation1 + $0x8] sm:$0xff pattern:$0x75316420]
        %v325 = vsel %vm296, %v321, 0.0
        %v326 = vrot.slane %v325, 4
        %v327 = vadd.f32 %v325, %v326
        %v328 = vrot.slane %v327, 2
        %v329 = vadd.f32 %v327, %v328
        %v330 = vrot.slane %v329, 1
        %v331 = vadd.f32 %v329, %v330
        %v332 = vsel %vm296, %v322, 0.0
        %v333 = vrot.slane %v332, 4
        %v334 = vadd.f32 %v332, %v333
        %v335 = vrot.slane %v334, 2
        %v336 = vadd.f32 %v334, %v335
        %v337 = vrot.slane %v336, 1
        %v338 = vadd.f32 %v336, %v337
        %v339 = vlog2.pop %v331
        %v340 = vmul.f32 %v339, 0.6931472
        %v341 = vlog2.pop %v338
        %v342 = vmul.f32 %v341, 0.6931472
        %v343 = vlaneseq
        %v344 = vshrl.u32 %v343, 7
        %v345 = vperm.slane %v289, 0
        %v346 = vperm.slane %v289, 1
        %vm347 = vcmp.eq.s32.totalorder %v344, %v345
        %vm348 = vcmp.eq.s32.totalorder %v344, %v346
        %350 = vst [vmem:[#allocation1] ss:$2 sm:$0xff] %v316
        %v351 = vld.sshfl [vmem:[#allocation1] sm:$0xff pattern:$0x75316420]
        %v352 = vld.sshfl [vmem:[#allocation1 + $0x8] sm:$0xff pattern:$0x75316420]
        %v355 = vsel %vm347, %v351, 0.0
        %v356 = vsel %vm348, %v352, 0.0
        %v357 = vsel %vm296, %v355, 0.0
        %v358 = vrot.slane %v357, 4
        %v359 = vadd.f32 %v357, %v358
        %v360 = vrot.slane %v359, 2
        %v361 = vadd.f32 %v359, %v360
        %v362 = vrot.slane %v361, 1
        %v363 = vadd.f32 %v361, %v362
        %v364 = vsel %vm296, %v356, 0.0
        %v365 = vrot.slane %v364, 4
        %v366 = vadd.f32 %v364, %v365
        %v367 = vrot.slane %v366, 2
        %v368 = vadd.f32 %v366, %v367
        %v369 = vrot.slane %v368, 1
        %v370 = vadd.f32 %v368, %v369
        %v371 = vsub.f32 %v363, %v340
        %v372 = vsub.f32 %v370, %v342
        %v373 = vmul.f32 %v371, 1.442695
        %v374 = vpow.pop %v373
        %v375 = vmul.f32 %v372, 1.442695
        %v376 = vpow.pop %v375
        %v377 = vsub.f32 1.0, %v374
        %v378 = vsub.f32 1.0, %v376
        %v379 = vmul.f32 %v377, %v377
        %v380 = vmul.f32 %v378, %v378
        %v381 = vmul.f32 %v379, %v371
        %v382 = vmul.f32 %v380, %v372
        %vm383 = vcmp.ne.s32.totalorder %v289, 4294967196
        %v384 = vsub.f32 0.0, %v381
        %v385 = vsub.f32 0.0, %v382
        %v388 = vrot.slane %v385, 7
        %vm389 = vcmask 1040384
        %v390 = vsel %vm389, %v384, %v388
        %v392 = vsel %vm383, %v390, 0.0
        %v393 = vsel %vm383, 1, 0
        %v394 = vcvt.s32.f32 %v393
        %v395 = vld [vmem:[%s264] sm:$0x3]
        %v396 = vadd.f32 %v395, %v392
        %v397 = vlaneseq
        %vm398 = vcmp.ge.s32.totalorder %v397, 0
        %vm399 = vcmp.lt.s32.totalorder %v397, 256
        %vm400 = vmand %vm398, %vm399
        %401 = vst.msk [vmem:[%s264] sm:$0x3] %vm400, %v396
        %v402 = vld [vmem:[%s271] sm:$0x3]
        %v403 = vadd.f32 %v402, %v394
        %404 = vst.msk [vmem:[%s271] sm:$0x3] %vm400, %v403
        %s405 = sand.u32 %s114, 1
        %s406 = scalar_lea.sflag [#allocation4], %s405
        %s407 = sand.u32 %s114, 1
        %s408 = smul.addr %s407, 2
        %s409 = scalar_lea.vmem [#allocation7], %s408
        %s410 = sand.u32 %s140, 1
        %s411 = scalar_lea.sflag [#allocation9], %s410
        %s412 = sand.u32 %s140, 1
        %s413 = smul.addr %s412, 2
        %s414 = scalar_lea.vmem [#allocation8], %s413
        // Predicated region
        $region41: #{tpu_custom_call.1} parent=27 // pred_check
          %p415 = pneg %p124
        $region42: #{tpu_custom_call.1} parent=27 // pred_check_branch
          %417 = sbr.rel (%p415) target = $region44
        $region43: #{tpu_custom_call.1} parent=27 // pred_region
          %419 = vsyncadd %s406, 0
          %s420 = smul.addr %s32, 2
          %s421 = scalar_lea.hbm %s2, %s420
          %s423 = sshll.u32 %s409, 4
          %s424 = int_to_ptr.vmem [resolvable:$true] %s423
          %s425 = sshll.u32 %s421, 4
          %s426 = int_to_ptr.hbm [resolvable:$true] %s425
          %428 = dma.vmem_to_hbm [thread:$0]  %s424, 32, %s426, %s406
        $region44: #{tpu_custom_call.1} parent=27 // pred_fallthru
          _
        // Predicated region
        $region45: #{tpu_custom_call.1} parent=27 // pred_check
          %p429 = pneg %p150
        $region46: #{tpu_custom_call.1} parent=27 // pred_check_branch
          %431 = sbr.rel (%p429) target = $region48
        $region47: #{tpu_custom_call.1} parent=27 // pred_region
          %433 = vsyncadd %s411, 0
          %s434 = smul.addr %s32, 2
          %s435 = scalar_lea.hbm %s3, %s434
          %s437 = sshll.u32 %s414, 4
          %s438 = int_to_ptr.vmem [resolvable:$true] %s437
          %s439 = sshll.u32 %s435, 4
          %s440 = int_to_ptr.hbm [resolvable:$true] %s439
          %442 = dma.vmem_to_hbm [thread:$0]  %s438, 32, %s440, %s411
        $region48: #{tpu_custom_call.1} parent=27 // pred_fallthru
          _
      $region28: #{tpu_custom_call.1} parent=5 // pred_fallthru
        _
      %p443 = scmp.le.s32.totalorder 2, %s22
      // Predicated region
      $region49: #{tpu_custom_call.1} parent=5 // pred_check
        %p444 = pneg %p443
      $region50: #{tpu_custom_call.1} parent=5 // pred_check_branch
        %446 = sbr.rel (%p444) target = $region52
      $region51: #{tpu_custom_call.1} parent=5 // pred_region
        %s447 = ssub.s32 %s22, 2
        // Predicated region
        $region53: #{tpu_custom_call.1} parent=51 // pred_check
          %p448 = pneg %p130
        $region54: #{tpu_custom_call.1} parent=51 // pred_check_branch
          %450 = sbr.rel (%p448) target = $region56
        $region55: #{tpu_custom_call.1} parent=51 // pred_region
          %s451 = sand.u32 %s115, 1
          %s452 = scalar_lea.sflag [#allocation4], %s451
          %s453 = sand.u32 %s115, 1
          %s454 = smul.addr %s453, 2
          %s455 = scalar_lea.vmem [#allocation7], %s454
          %457 = dma.done %s452, 32
        $region56: #{tpu_custom_call.1} parent=51 // pred_fallthru
          _
        // Predicated region
        $region57: #{tpu_custom_call.1} parent=51 // pred_check
          %p458 = pneg %p156
        $region58: #{tpu_custom_call.1} parent=51 // pred_check_branch
          %460 = sbr.rel (%p458) target = $region60
        $region59: #{tpu_custom_call.1} parent=51 // pred_region
          %s461 = sand.u32 %s141, 1
          %s462 = scalar_lea.sflag [#allocation9], %s461
          %s463 = sand.u32 %s141, 1
          %s464 = smul.addr %s463, 2
          %s465 = scalar_lea.vmem [#allocation8], %s464
          %467 = dma.done %s462, 32
        $region60: #{tpu_custom_call.1} parent=51 // pred_fallthru
          _
      $region52: #{tpu_custom_call.1} parent=5 // pred_fallthru
        _
    $region6: #{tpu_custom_call.1} parent=1 // loop_footer
      %s26 = sadd.s32 1, %s22
    $region7: #{tpu_custom_call.1} parent=1 // loop_footer_branch
      %21 = sbr.rel target = $region3
    $region8: #{tpu_custom_call.1} parent=1 // loop_exit
      _
    %468 = vsyncpa [#allocation3], 1
    %s469 = scalar_lea.sflag [#allocation3], 1
    %470 = vsyncpa %s469, 1
    %471 = vsyncpa [#allocation6], 1
    %s472 = scalar_lea.sflag [#allocation6], 1
    %473 = vsyncpa %s472, 1
    %474 = vsyncpa [#allocation4], 1
    %s475 = scalar_lea.sflag [#allocation4], 1
    %476 = vsyncpa %s475, 1
    %477 = vsyncpa [#allocation9], 1
    %s478 = scalar_lea.sflag [#allocation9], 1
    %479 = vsyncpa %s478, 1

</llo_original>
